<compile_context>
chip_gen: v5e
topology: v5e:2x2
jax: 0.10.0
libtpu: 0.0.40
codegen_flags: <defaults>
</compile_context>

<pallas_src>
import functools

import jax
import jax.numpy as jnp
import numpy as np
from jax.experimental import pallas as pl
from jax.experimental.pallas import tpu as pltpu


def _round_up(x, m):
    return ((x + m - 1) // m) * m


def _fused_mlp_kernel(x_ref, w1_ref, b1_ref, w2_ref, b2_ref, w3_ref, b3_ref,
                      o_ref, *, num_models):
    # x_ref : (tn, D) batch tile.
    # w1_ref: (M, D, H1)   b1_ref: (M, 1, H1)
    # w2_ref: (M, H1, H2)  b2_ref: (M, 1, H2)
    # w3_ref: (M, H2, O)   b3_ref: (M, 1, O)
    # o_ref : (tn, M*O)  -- lane-dense concatenated output.
    x = x_ref[...]
    outs = []
    for m in range(num_models):  # static loop, traced once (M is small)
        h = jnp.dot(x, w1_ref[m], preferred_element_type=jnp.float32) + b1_ref[m]
        h = jnp.maximum(h, 0.0)                                  # ReLU
        h = jnp.dot(h, w2_ref[m], preferred_element_type=jnp.float32) + b2_ref[m]
        h = jnp.maximum(h, 0.0)                                  # ReLU
        o = jnp.dot(h, w3_ref[m], preferred_element_type=jnp.float32) + b3_ref[m]
        outs.append(o)
    o_ref[...] = jnp.concatenate(outs, axis=1).astype(o_ref.dtype)


def multiple_mlp_forward(data, params, *, tile_n=256):
    """data: any shape (N, ...); flattened to (N, D) like torch's .view(N, -1)."""
    w1, b1, w2, b2, w3, b3 = params
    N = data.shape[0]
    x = data.reshape(N, -1)
    D = x.shape[1]
    M, _, H1 = w1.shape
    H2 = w2.shape[2]
    O = w3.shape[2]

    # Tile the batch axis only.  Pad rows so the tile is sublane-aligned (x8)
    # and evenly divides the (padded) batch.
    tn = min(_round_up(tile_n, 8), _round_up(N, 8))
    n_pad = _round_up(N, tn)
    if n_pad != N:
        x = jnp.pad(x, ((0, n_pad - N), (0, 0)))
    grid_n = n_pad // tn

    kernel = functools.partial(_fused_mlp_kernel, num_models=M)
    out = pl.pallas_call(
        kernel,
        out_shape=jax.ShapeDtypeStruct((n_pad, M * O), x.dtype),
        grid_spec=pltpu.PrefetchScalarGridSpec(
            num_scalar_prefetch=0,
            grid=(grid_n,),
            in_specs=[
                # Batch tile (only input that changes across the grid).
                pl.BlockSpec((tn, D), lambda i: (i, 0)),
                # All model weights resident in VMEM (constant index_map ->
                # fetched once, never re-streamed per grid step).
                pl.BlockSpec((M, D, H1), lambda i: (0, 0, 0)),
                pl.BlockSpec((M, 1, H1), lambda i: (0, 0, 0)),
                pl.BlockSpec((M, H1, H2), lambda i: (0, 0, 0)),
                pl.BlockSpec((M, 1, H2), lambda i: (0, 0, 0)),
                pl.BlockSpec((M, H2, O), lambda i: (0, 0, 0)),
                pl.BlockSpec((M, 1, O), lambda i: (0, 0, 0)),
            ],
            # Lane-dense (tn, M*O) output written directly; no wrapper
            # transpose/reshape pass over HBM.
            out_specs=pl.BlockSpec((tn, M * O), lambda i: (i, 0)),
        ),
        compiler_params=pltpu.CompilerParams(
            dimension_semantics=("parallel",)),
    )(x, w1, b1, w2, b2, w3, b3)

    return out[:N] if n_pad != N else out


def init_params(key, num_models, input_dim, layer_widths, num_out, dtype=jnp.float32):
    """Deterministic Xavier-normal-style init (gain sqrt(2) for ReLU hidden layers).

    Note: PyTorch's default nn.Linear init is kaiming-uniform; for exact parity
    with a torch checkpoint, load torch weights (transposed) instead.
    """
    h1, h2 = layer_widths
    ks = jax.random.split(key, 3)

    def xavier(k, fan_in, fan_out, gain):
        std = gain * np.sqrt(2.0 / (fan_in + fan_out))
        return std * jax.random.normal(k, (num_models, fan_in, fan_out), dtype)

    gain_relu = float(np.sqrt(2.0))
    w1 = xavier(ks[0], input_dim, h1, gain_relu)
    w2 = xavier(ks[1], h1, h2, gain_relu)
    w3 = xavier(ks[2], h2, num_out, 1.0)
    b1 = jnp.zeros((num_models, 1, h1), dtype)
    b2 = jnp.zeros((num_models, 1, h2), dtype)
    b3 = jnp.zeros((num_models, 1, num_out), dtype)
    return (w1, b1, w2, b2, w3, b3)


def reference_forward(data, params):
    w1, b1, w2, b2, w3, b3 = params
    x = data.reshape(data.shape[0], -1)
    outs = []
    for m in range(w1.shape[0]):
        h = jnp.maximum(x @ w1[m] + b1[m], 0.0)
        h = jnp.maximum(h @ w2[m] + b2[m], 0.0)
        outs.append(h @ w3[m] + b3[m])
    return jnp.concatenate(outs, axis=1)


if __name__ == "__main__":
    num_models = 3
    input_dim = 32
    layer_widths = [64, 64]
    num_out = 1
    batch = 8

    key = jax.random.PRNGKey(0)
    k_x, k_p = jax.random.split(key)
    x = jax.random.normal(k_x, (batch, input_dim), jnp.float32)
    params = init_params(k_p, num_models, input_dim, layer_widths, num_out)

    y = multiple_mlp_forward(x, params)
    y = jax.block_until_ready(y)
    y_ref = reference_forward(x, params)
    assert y.shape == (batch, num_models * num_out), y.shape
    np.testing.assert_allclose(np.asarray(y), np.asarray(y_ref), rtol=1e-5, atol=1e-5)

    # Exercise the batch-padding path (N not a multiple of the sublane tile).
    x2 = jax.random.normal(jax.random.PRNGKey(1), (10, input_dim), jnp.float32)
    y2 = jax.block_until_ready(multiple_mlp_forward(x2, params))
    np.testing.assert_allclose(
        np.asarray(y2), np.asarray(reference_forward(x2, params)),
        rtol=1e-5, atol=1e-5)

    print("KERNEL_OK")
</pallas_src>

<mosaic_0001>
module attributes {stable_mosaic.version = 11 : i64} {
  func.func @_fused_mlp_kernel(%arg0: i32, %arg1: memref<8x32xf32, #tpu.memory_space<vmem>>, %arg2: memref<3x32x64xf32, #tpu.memory_space<vmem>>, %arg3: memref<3x1x64xf32, #tpu.memory_space<vmem>>, %arg4: memref<3x64x64xf32, #tpu.memory_space<vmem>>, %arg5: memref<3x1x64xf32, #tpu.memory_space<vmem>>, %arg6: memref<3x64x1xf32, #tpu.memory_space<vmem>>, %arg7: memref<3x1x1xf32, #tpu.memory_space<vmem>>, %arg8: memref<8x3xf32, #tpu.memory_space<vmem>>) attributes {dimension_semantics = [#tpu.dimension_semantics<parallel>], iteration_bounds = array<i64: 1>, scalar_prefetch = 0 : i64, scratch_operands = 0 : i64, tpu.core_type = #tpu.core_type<tc>, window_params = [{transform_indices = @transform_0, window_bounds = array<i64: 8, 32>}, {pipeline_mode = #tpu.pipeline_mode<synchronous>, transform_indices = @transform_1, window_bounds = array<i64: 3, 32, 64>}, {pipeline_mode = #tpu.pipeline_mode<synchronous>, transform_indices = @transform_2, window_bounds = array<i64: 3, 1, 64>}, {pipeline_mode = #tpu.pipeline_mode<synchronous>, transform_indices = @transform_3, window_bounds = array<i64: 3, 64, 64>}, {pipeline_mode = #tpu.pipeline_mode<synchronous>, transform_indices = @transform_4, window_bounds = array<i64: 3, 1, 64>}, {pipeline_mode = #tpu.pipeline_mode<synchronous>, transform_indices = @transform_5, window_bounds = array<i64: 3, 64, 1>}, {pipeline_mode = #tpu.pipeline_mode<synchronous>, transform_indices = @transform_6, window_bounds = array<i64: 3, 1, 1>}, {transform_indices = @transform_7, window_bounds = array<i64: 8, 3>}]} {
    %c0 = arith.constant 0 : index
    %c0_0 = arith.constant 0 : index
    %0 = vector.load %arg1[%c0, %c0_0] : memref<8x32xf32, #tpu.memory_space<vmem>>, vector<8x32xf32>
    %c0_1 = arith.constant 0 : index
    %c0_2 = arith.constant 0 : index
    %c0_3 = arith.constant 0 : index
    %1 = vector.load %arg2[%c0_1, %c0_2, %c0_3] : memref<3x32x64xf32, #tpu.memory_space<vmem>>, vector<1x32x64xf32>
    %2 = vector.shape_cast %1 : vector<1x32x64xf32> to vector<32x64xf32>
    %cst = arith.constant dense<0.000000e+00> : vector<8x64xf32>
    %3 = tpu.matmul %0, %2, %cst {dimension_numbers = #tpu.dot_dimension_numbers<[1], [0], [0], [1], [0, 0, 1, 1], [], []>} : vector<8x32xf32>, vector<32x64xf32>, vector<8x64xf32> -> vector<8x64xf32>
    %c0_4 = arith.constant 0 : index
    %c0_5 = arith.constant 0 : index
    %c0_6 = arith.constant 0 : index
    %4 = vector.load %arg3[%c0_4, %c0_5, %c0_6] : memref<3x1x64xf32, #tpu.memory_space<vmem>>, vector<1x1x64xf32>
    %5 = vector.shape_cast %4 : vector<1x1x64xf32> to vector<1x64xf32>
    %6 = vector.broadcast %5 : vector<1x64xf32> to vector<8x64xf32>
    %7 = arith.addf %3, %6 : vector<8x64xf32>
    %cst_7 = arith.constant 0.000000e+00 : f32
    %8 = vector.broadcast %cst_7 : f32 to vector<8x64xf32>
    %9 = arith.maximumf %7, %8 : vector<8x64xf32>
    %c0_8 = arith.constant 0 : index
    %c0_9 = arith.constant 0 : index
    %c0_10 = arith.constant 0 : index
    %10 = vector.load %arg4[%c0_8, %c0_9, %c0_10] : memref<3x64x64xf32, #tpu.memory_space<vmem>>, vector<1x64x64xf32>
    %11 = vector.shape_cast %10 : vector<1x64x64xf32> to vector<64x64xf32>
    %cst_11 = arith.constant dense<0.000000e+00> : vector<8x64xf32>
    %12 = tpu.matmul %9, %11, %cst_11 {dimension_numbers = #tpu.dot_dimension_numbers<[1], [0], [0], [1], [0, 0, 1, 1], [], []>} : vector<8x64xf32>, vector<64x64xf32>, vector<8x64xf32> -> vector<8x64xf32>
    %c0_12 = arith.constant 0 : index
    %c0_13 = arith.constant 0 : index
    %c0_14 = arith.constant 0 : index
    %13 = vector.load %arg5[%c0_12, %c0_13, %c0_14] : memref<3x1x64xf32, #tpu.memory_space<vmem>>, vector<1x1x64xf32>
    %14 = vector.shape_cast %13 : vector<1x1x64xf32> to vector<1x64xf32>
    %15 = vector.broadcast %14 : vector<1x64xf32> to vector<8x64xf32>
    %16 = arith.addf %12, %15 : vector<8x64xf32>
    %cst_15 = arith.constant 0.000000e+00 : f32
    %17 = vector.broadcast %cst_15 : f32 to vector<8x64xf32>
    %18 = arith.maximumf %16, %17 : vector<8x64xf32>
    %c0_16 = arith.constant 0 : index
    %c0_17 = arith.constant 0 : index
    %c0_18 = arith.constant 0 : index
    %19 = vector.load %arg6[%c0_16, %c0_17, %c0_18] : memref<3x64x1xf32, #tpu.memory_space<vmem>>, vector<1x64x1xf32>
    %20 = vector.shape_cast %19 : vector<1x64x1xf32> to vector<64x1xf32>
    %cst_19 = arith.constant dense<0.000000e+00> : vector<8x1xf32>
    %21 = tpu.matmul %18, %20, %cst_19 {dimension_numbers = #tpu.dot_dimension_numbers<[1], [0], [0], [1], [0, 0, 1, 1], [], []>} : vector<8x64xf32>, vector<64x1xf32>, vector<8x1xf32> -> vector<8x1xf32>
    %c0_20 = arith.constant 0 : index
    %c0_21 = arith.constant 0 : index
    %c0_22 = arith.constant 0 : index
    %22 = vector.load %arg7[%c0_20, %c0_21, %c0_22] : memref<3x1x1xf32, #tpu.memory_space<vmem>>, vector<1x1x1xf32>
    %23 = vector.shape_cast %22 : vector<1x1x1xf32> to vector<1x1xf32>
    %24 = vector.broadcast %23 : vector<1x1xf32> to vector<8x1xf32>
    %25 = arith.addf %21, %24 : vector<8x1xf32>
    %c1 = arith.constant 1 : index
    %c0_23 = arith.constant 0 : index
    %c0_24 = arith.constant 0 : index
    %26 = vector.load %arg2[%c1, %c0_23, %c0_24] : memref<3x32x64xf32, #tpu.memory_space<vmem>>, vector<1x32x64xf32>
    %27 = vector.shape_cast %26 : vector<1x32x64xf32> to vector<32x64xf32>
    %cst_25 = arith.constant dense<0.000000e+00> : vector<8x64xf32>
    %28 = tpu.matmul %0, %27, %cst_25 {dimension_numbers = #tpu.dot_dimension_numbers<[1], [0], [0], [1], [0, 0, 1, 1], [], []>} : vector<8x32xf32>, vector<32x64xf32>, vector<8x64xf32> -> vector<8x64xf32>
    %c1_26 = arith.constant 1 : index
    %c0_27 = arith.constant 0 : index
    %c0_28 = arith.constant 0 : index
    %29 = vector.load %arg3[%c1_26, %c0_27, %c0_28] : memref<3x1x64xf32, #tpu.memory_space<vmem>>, vector<1x1x64xf32>
    %30 = vector.shape_cast %29 : vector<1x1x64xf32> to vector<1x64xf32>
    %31 = vector.broadcast %30 : vector<1x64xf32> to vector<8x64xf32>
    %32 = arith.addf %28, %31 : vector<8x64xf32>
    %cst_29 = arith.constant 0.000000e+00 : f32
    %33 = vector.broadcast %cst_29 : f32 to vector<8x64xf32>
    %34 = arith.maximumf %32, %33 : vector<8x64xf32>
    %c1_30 = arith.constant 1 : index
    %c0_31 = arith.constant 0 : index
    %c0_32 = arith.constant 0 : index
    %35 = vector.load %arg4[%c1_30, %c0_31, %c0_32] : memref<3x64x64xf32, #tpu.memory_space<vmem>>, vector<1x64x64xf32>
    %36 = vector.shape_cast %35 : vector<1x64x64xf32> to vector<64x64xf32>
    %cst_33 = arith.constant dense<0.000000e+00> : vector<8x64xf32>
    %37 = tpu.matmul %34, %36, %cst_33 {dimension_numbers = #tpu.dot_dimension_numbers<[1], [0], [0], [1], [0, 0, 1, 1], [], []>} : vector<8x64xf32>, vector<64x64xf32>, vector<8x64xf32> -> vector<8x64xf32>
    %c1_34 = arith.constant 1 : index
    %c0_35 = arith.constant 0 : index
    %c0_36 = arith.constant 0 : index
    %38 = vector.load %arg5[%c1_34, %c0_35, %c0_36] : memref<3x1x64xf32, #tpu.memory_space<vmem>>, vector<1x1x64xf32>
    %39 = vector.shape_cast %38 : vector<1x1x64xf32> to vector<1x64xf32>
    %40 = vector.broadcast %39 : vector<1x64xf32> to vector<8x64xf32>
    %41 = arith.addf %37, %40 : vector<8x64xf32>
    %cst_37 = arith.constant 0.000000e+00 : f32
    %42 = vector.broadcast %cst_37 : f32 to vector<8x64xf32>
    %43 = arith.maximumf %41, %42 : vector<8x64xf32>
    %c1_38 = arith.constant 1 : index
    %c0_39 = arith.constant 0 : index
    %c0_40 = arith.constant 0 : index
    %44 = vector.load %arg6[%c1_38, %c0_39, %c0_40] : memref<3x64x1xf32, #tpu.memory_space<vmem>>, vector<1x64x1xf32>
    %45 = vector.shape_cast %44 : vector<1x64x1xf32> to vector<64x1xf32>
    %cst_41 = arith.constant dense<0.000000e+00> : vector<8x1xf32>
    %46 = tpu.matmul %43, %45, %cst_41 {dimension_numbers = #tpu.dot_dimension_numbers<[1], [0], [0], [1], [0, 0, 1, 1], [], []>} : vector<8x64xf32>, vector<64x1xf32>, vector<8x1xf32> -> vector<8x1xf32>
    %c1_42 = arith.constant 1 : index
    %c0_43 = arith.constant 0 : index
    %c0_44 = arith.constant 0 : index
    %47 = vector.load %arg7[%c1_42, %c0_43, %c0_44] : memref<3x1x1xf32, #tpu.memory_space<vmem>>, vector<1x1x1xf32>
    %48 = vector.shape_cast %47 : vector<1x1x1xf32> to vector<1x1xf32>
    %49 = vector.broadcast %48 : vector<1x1xf32> to vector<8x1xf32>
    %50 = arith.addf %46, %49 : vector<8x1xf32>
    %c2 = arith.constant 2 : index
    %c0_45 = arith.constant 0 : index
    %c0_46 = arith.constant 0 : index
    %51 = vector.load %arg2[%c2, %c0_45, %c0_46] : memref<3x32x64xf32, #tpu.memory_space<vmem>>, vector<1x32x64xf32>
    %52 = vector.shape_cast %51 : vector<1x32x64xf32> to vector<32x64xf32>
    %cst_47 = arith.constant dense<0.000000e+00> : vector<8x64xf32>
    %53 = tpu.matmul %0, %52, %cst_47 {dimension_numbers = #tpu.dot_dimension_numbers<[1], [0], [0], [1], [0, 0, 1, 1], [], []>} : vector<8x32xf32>, vector<32x64xf32>, vector<8x64xf32> -> vector<8x64xf32>
    %c2_48 = arith.constant 2 : index
    %c0_49 = arith.constant 0 : index
    %c0_50 = arith.constant 0 : index
    %54 = vector.load %arg3[%c2_48, %c0_49, %c0_50] : memref<3x1x64xf32, #tpu.memory_space<vmem>>, vector<1x1x64xf32>
    %55 = vector.shape_cast %54 : vector<1x1x64xf32> to vector<1x64xf32>
    %56 = vector.broadcast %55 : vector<1x64xf32> to vector<8x64xf32>
    %57 = arith.addf %53, %56 : vector<8x64xf32>
    %cst_51 = arith.constant 0.000000e+00 : f32
    %58 = vector.broadcast %cst_51 : f32 to vector<8x64xf32>
    %59 = arith.maximumf %57, %58 : vector<8x64xf32>
    %c2_52 = arith.constant 2 : index
    %c0_53 = arith.constant 0 : index
    %c0_54 = arith.constant 0 : index
    %60 = vector.load %arg4[%c2_52, %c0_53, %c0_54] : memref<3x64x64xf32, #tpu.memory_space<vmem>>, vector<1x64x64xf32>
    %61 = vector.shape_cast %60 : vector<1x64x64xf32> to vector<64x64xf32>
    %cst_55 = arith.constant dense<0.000000e+00> : vector<8x64xf32>
    %62 = tpu.matmul %59, %61, %cst_55 {dimension_numbers = #tpu.dot_dimension_numbers<[1], [0], [0], [1], [0, 0, 1, 1], [], []>} : vector<8x64xf32>, vector<64x64xf32>, vector<8x64xf32> -> vector<8x64xf32>
    %c2_56 = arith.constant 2 : index
    %c0_57 = arith.constant 0 : index
    %c0_58 = arith.constant 0 : index
    %63 = vector.load %arg5[%c2_56, %c0_57, %c0_58] : memref<3x1x64xf32, #tpu.memory_space<vmem>>, vector<1x1x64xf32>
    %64 = vector.shape_cast %63 : vector<1x1x64xf32> to vector<1x64xf32>
    %65 = vector.broadcast %64 : vector<1x64xf32> to vector<8x64xf32>
    %66 = arith.addf %62, %65 : vector<8x64xf32>
    %cst_59 = arith.constant 0.000000e+00 : f32
    %67 = vector.broadcast %cst_59 : f32 to vector<8x64xf32>
    %68 = arith.maximumf %66, %67 : vector<8x64xf32>
    %c2_60 = arith.constant 2 : index
    %c0_61 = arith.constant 0 : index
    %c0_62 = arith.constant 0 : index
    %69 = vector.load %arg6[%c2_60, %c0_61, %c0_62] : memref<3x64x1xf32, #tpu.memory_space<vmem>>, vector<1x64x1xf32>
    %70 = vector.shape_cast %69 : vector<1x64x1xf32> to vector<64x1xf32>
    %cst_63 = arith.constant dense<0.000000e+00> : vector<8x1xf32>
    %71 = tpu.matmul %68, %70, %cst_63 {dimension_numbers = #tpu.dot_dimension_numbers<[1], [0], [0], [1], [0, 0, 1, 1], [], []>} : vector<8x64xf32>, vector<64x1xf32>, vector<8x1xf32> -> vector<8x1xf32>
    %c2_64 = arith.constant 2 : index
    %c0_65 = arith.constant 0 : index
    %c0_66 = arith.constant 0 : index
    %72 = vector.load %arg7[%c2_64, %c0_65, %c0_66] : memref<3x1x1xf32, #tpu.memory_space<vmem>>, vector<1x1x1xf32>
    %73 = vector.shape_cast %72 : vector<1x1x1xf32> to vector<1x1xf32>
    %74 = vector.broadcast %73 : vector<1x1xf32> to vector<8x1xf32>
    %75 = arith.addf %71, %74 : vector<8x1xf32>
    %76 = tpu.concatenate %25, %50, %75 in 1 : vector<8x1xf32>, vector<8x1xf32>, vector<8x1xf32> -> vector<8x3xf32>
    %c0_67 = arith.constant 0 : index
    %c0_68 = arith.constant 0 : index
    %77 = vector.load %arg8[%c0_67, %c0_68] : memref<8x3xf32, #tpu.memory_space<vmem>>, vector<8x3xf32>
    tpu.vector_store %arg8[%c0_67, %c0_68], %76 {strides = array<i32>} : memref<8x3xf32, #tpu.memory_space<vmem>>, vector<8x3xf32>,
    return
  }
  func.func @transform_0(%arg0: i32) -> (i32, i32) {
    %c0_i32 = arith.constant 0 : i32
    %c0_i32_0 = arith.constant 0 : i32
    return %arg0, %c0_i32 : i32, i32
  }
  func.func @transform_1(%arg0: i32) -> (i32, i32, i32) {
    %c0_i32 = arith.constant 0 : i32
    %c0_i32_0 = arith.constant 0 : i32
    %c0_i32_1 = arith.constant 0 : i32
    %c0_i32_2 = arith.constant 0 : i32
    return %c0_i32, %c0_i32_0, %c0_i32_1 : i32, i32, i32
  }
  func.func @transform_2(%arg0: i32) -> (i32, i32, i32) {
    %c0_i32 = arith.constant 0 : i32
    %c0_i32_0 = arith.constant 0 : i32
    %c0_i32_1 = arith.constant 0 : i32
    %c0_i32_2 = arith.constant 0 : i32
    return %c0_i32, %c0_i32_0, %c0_i32_1 : i32, i32, i32
  }
  func.func @transform_3(%arg0: i32) -> (i32, i32, i32) {
    %c0_i32 = arith.constant 0 : i32
    %c0_i32_0 = arith.constant 0 : i32
    %c0_i32_1 = arith.constant 0 : i32
    %c0_i32_2 = arith.constant 0 : i32
    return %c0_i32, %c0_i32_0, %c0_i32_1 : i32, i32, i32
  }
  func.func @transform_4(%arg0: i32) -> (i32, i32, i32) {
    %c0_i32 = arith.constant 0 : i32
    %c0_i32_0 = arith.constant 0 : i32
    %c0_i32_1 = arith.constant 0 : i32
    %c0_i32_2 = arith.constant 0 : i32
    return %c0_i32, %c0_i32_0, %c0_i32_1 : i32, i32, i32
  }
  func.func @transform_5(%arg0: i32) -> (i32, i32, i32) {
    %c0_i32 = arith.constant 0 : i32
    %c0_i32_0 = arith.constant 0 : i32
    %c0_i32_1 = arith.constant 0 : i32
    %c0_i32_2 = arith.constant 0 : i32
    return %c0_i32, %c0_i32_0, %c0_i32_1 : i32, i32, i32
  }
  func.func @transform_6(%arg0: i32) -> (i32, i32, i32) {
    %c0_i32 = arith.constant 0 : i32
    %c0_i32_0 = arith.constant 0 : i32
    %c0_i32_1 = arith.constant 0 : i32
    %c0_i32_2 = arith.constant 0 : i32
    return %c0_i32, %c0_i32_0, %c0_i32_1 : i32, i32, i32
  }
  func.func @transform_7(%arg0: i32) -> (i32, i32) {
    %c0_i32 = arith.constant 0 : i32
    %c0_i32_0 = arith.constant 0 : i32
    return %arg0, %c0_i32 : i32, i32
  }
}

</mosaic_0001>

<llo_original>
// kernel: tpu_custom_call.1
$region0: #{tpu_custom_call.1}
  #allocation0 [shape = 'u32[]', space=smem, size = 0x4, offset = 0x4, fixed_abs, tag = 'smem constant byte address 0x4 - core index']
  #allocation1 [shape = 'u32[72,128]{1,0:T(1,128)}', space=vmem, size = 0x9000, scoped, tag = 'internal scratch']
  %s0 = inlined_call_operand.hbm [shape: f32[8,32], index: 0, kind: input, shape index: {}]
  %s1 = inlined_call_operand.hbm [shape: f32[3,32,64], index: 1, kind: input, shape index: {}]
  %s2 = inlined_call_operand.vmem [shape: f32[3,1,64], index: 2, kind: input, shape index: {}]
  %s3 = inlined_call_operand.vmem [shape: f32[3,64,64], index: 3, kind: input, shape index: {}]
  %s4 = inlined_call_operand.hbm [shape: f32[3,1,64], index: 4, kind: input, shape index: {}]
  %s5 = inlined_call_operand.vmem [shape: f32[3,64,1], index: 5, kind: input, shape index: {}]
  %s6 = inlined_call_operand.vmem [shape: f32[3,1,1], index: 6, kind: input, shape index: {}]
  %s7 = inlined_call_operand.vmem [shape: f32[8,3], index: 7, kind: output, shape index: {}]
  %s8 = sld [smem:[#allocation0]]
  $region50: #{tpu_custom_call.1} parent=0
    _
  %s10 = ssub.s32 1, %s8
  %s11 = scalar_select 0, %s10, %s8
  $region1: #{tpu_custom_call.1} parent=0
    #allocation2 [shape = 'u8[4096]{0}', space=vmem, size = 0x1000, scoped, tag = 'input window, operand 0, single buffered']
    #allocation3 [shape = 's32[1]{0}', space=sflag, size = 0x4, scoped, tag = 'scoped memory for tpu_custom_call.1']
    #allocation4 [shape = 'u8[49152]{0}', space=vmem, size = 0xc000, scoped, tag = 'input window, operand 1, single buffered']
    #allocation5 [shape = 's32[1]{0}', space=sflag, size = 0x4, scoped, tag = 'scoped memory for tpu_custom_call.1']
    #allocation6 [shape = 'u8[1536]{0}', space=vmem, size = 0x800, scoped, tag = 'input window, operand 4, single buffered']
    %12 = vsyncpa [#allocation3], 0
    %13 = vsyncpa [#allocation5], 0
    // Predicated region
    $region2: #{tpu_custom_call.1} parent=1 // pred_check
      _
    $region3: #{tpu_custom_call.1} parent=1 // pred_check_branch
      %15 = sbr.rel (0) target = $region5
    $region4: #{tpu_custom_call.1} parent=1 // pred_region
      %17 = vsyncadd [#allocation3], 0
      %s19 = sshll.u32 %s0, 4
      %s20 = int_to_ptr.hbm [resolvable:$true] %s19
      %s21 = sshll.u32 [#allocation2], 4
      %s22 = int_to_ptr.vmem [resolvable:$true] %s21
      %24 = dma.hbm_to_vmem [thread:$0]  %s20, 128, %s22, [#allocation3]
    $region5: #{tpu_custom_call.1} parent=1 // pred_fallthru
      _
    // Predicated region
    $region6: #{tpu_custom_call.1} parent=1 // pred_check
      _
    $region7: #{tpu_custom_call.1} parent=1 // pred_check_branch
      %26 = sbr.rel (0) target = $region9
    $region8: #{tpu_custom_call.1} parent=1 // pred_region
      %28 = vsyncadd [#allocation5], 0
      %s29 = sshll.u32 %s1, 4
      %s30 = int_to_ptr.hbm [resolvable:$true] %s29
      %s31 = sshll.u32 [#allocation4], 4
      %s32 = int_to_ptr.vmem [resolvable:$true] %s31
      %37 = dma.hbm_to_vmem [thread:$0]  %s30, 1536, %s32, [#allocation5], 128, 128, 8
    $region9: #{tpu_custom_call.1} parent=1 // pred_fallthru
      _
    // Predicated region
    $region10: #{tpu_custom_call.1} parent=1 // pred_check
      _
    $region11: #{tpu_custom_call.1} parent=1 // pred_check_branch
      %39 = sbr.rel (0) target = $region13
    $region12: #{tpu_custom_call.1} parent=1 // pred_region
      _
    $region13: #{tpu_custom_call.1} parent=1 // pred_fallthru
      _
    // Predicated region
    $region14: #{tpu_custom_call.1} parent=1 // pred_check
      _
    $region15: #{tpu_custom_call.1} parent=1 // pred_check_branch
      %41 = sbr.rel (0) target = $region17
    $region16: #{tpu_custom_call.1} parent=1 // pred_region
      _
    $region17: #{tpu_custom_call.1} parent=1 // pred_fallthru
      _
    // Predicated region
    $region18: #{tpu_custom_call.1} parent=1 // pred_check
      _
    $region19: #{tpu_custom_call.1} parent=1 // pred_check_branch
      %43 = sbr.rel (0) target = $region21
    $region20: #{tpu_custom_call.1} parent=1 // pred_region
      %45 = vsyncadd [#allocation5], 0
      %s46 = sshll.u32 %s4, 4
      %s47 = int_to_ptr.hbm [resolvable:$true] %s46
      %s48 = sshll.u32 [#allocation6], 4
      %s49 = int_to_ptr.vmem [resolvable:$true] %s48
      %54 = dma.hbm_to_vmem [thread:$0]  %s47, 48, %s49, [#allocation5], 16, 16, 1
    $region21: #{tpu_custom_call.1} parent=1 // pred_fallthru
      _
    // Predicated region
    $region22: #{tpu_custom_call.1} parent=1 // pred_check
      _
    $region23: #{tpu_custom_call.1} parent=1 // pred_check_branch
      %56 = sbr.rel (0) target = $region25
    $region24: #{tpu_custom_call.1} parent=1 // pred_region
      _
    $region25: #{tpu_custom_call.1} parent=1 // pred_fallthru
      _
    // Predicated region
    $region26: #{tpu_custom_call.1} parent=1 // pred_check
      _
    $region27: #{tpu_custom_call.1} parent=1 // pred_check_branch
      %58 = sbr.rel (0) target = $region29
    $region28: #{tpu_custom_call.1} parent=1 // pred_region
      _
    $region29: #{tpu_custom_call.1} parent=1 // pred_fallthru
      _
    // Predicated region
    $region30: #{tpu_custom_call.1} parent=1 // pred_check
      _
    $region31: #{tpu_custom_call.1} parent=1 // pred_check_branch
      %60 = sbr.rel (0) target = $region33
    $region32: #{tpu_custom_call.1} parent=1 // pred_region
      %62 = dma.done [#allocation3], 128
    $region33: #{tpu_custom_call.1} parent=1 // pred_fallthru
      _
    // Predicated region
    $region34: #{tpu_custom_call.1} parent=1 // pred_check
      _
    $region35: #{tpu_custom_call.1} parent=1 // pred_check_branch
      %64 = sbr.rel (0) target = $region37
    $region36: #{tpu_custom_call.1} parent=1 // pred_region
      %66 = dma.done [#allocation5], 1536
    $region37: #{tpu_custom_call.1} parent=1 // pred_fallthru
      _
    // Predicated region
    $region38: #{tpu_custom_call.1} parent=1 // pred_check
      _
    $region39: #{tpu_custom_call.1} parent=1 // pred_check_branch
      %68 = sbr.rel (0) target = $region41
    $region40: #{tpu_custom_call.1} parent=1 // pred_region
      %70 = dma.done [#allocation5], 48
    $region41: #{tpu_custom_call.1} parent=1 // pred_fallthru
      _
    %v71 = vld [vmem:[#allocation2] sm:$0xff]
    %v72 = vld [vmem:[#allocation4] sm:$0xff]
    %v73 = vld [vmem:[#allocation4 + $0x8] sm:$0xff]
    %v74 = vld [vmem:[#allocation4 + $0x10] sm:$0xff]
    %v75 = vld [vmem:[#allocation4 + $0x18] sm:$0xff]
    %v76 = vld [vmem:[%s2] sm:$0x1]
    %v78 = vperm.slane %v76, 0
    %vm80 = vcmask 261120
    %v82 = vsel %vm80, %v71, 0
    %84 = vmatpush.msra.mxu0 0.0
    %85 = vmatpush.msra.mxu0 0.0
    %86 = vmatpush.msra.mxu0 0.0
    %87 = vmatpush.msra.mxu0 0.0
    %88 = vmatpush.msra.mxu0 0.0
    %89 = vmatpush.msra.mxu0 0.0
    %90 = vmatpush.msra.mxu0 0.0
    %91 = vmatpush.msra.mxu0 0.0
    %92 = vmatpush.msra.mxu0 0.0
    %93 = vmatpush.msra.mxu0 0.0
    %94 = vmatpush.msra.mxu0 0.0
    %95 = vmatpush.msra.mxu0 0.0
    %96 = vmatpush.msra.mxu0 %v75
    %97 = vmatpush.msra.mxu0 %v74
    %98 = vmatpush.msra.mxu0 %v73
    %99 = vmatpush.msra.mxu0 %v72
    %100 = vmatmul.f32.gmra.mxu0 %v82
    %v101 = vpop.f32.mrf.mxu0
    %v102 = vadd.f32 %v78, %v101
    %103 = vdwg.mxu0
    %v104 = vmax.f32 %v102, 0.0
    %v105 = vld [vmem:[%s3] sm:$0xff]
    %v106 = vld [vmem:[%s3 + $0x8] sm:$0xff]
    %v107 = vld [vmem:[%s3 + $0x10] sm:$0xff]
    %v108 = vld [vmem:[%s3 + $0x18] sm:$0xff]
    %v109 = vld [vmem:[%s3 + $0x20] sm:$0xff]
    %v110 = vld [vmem:[%s3 + $0x28] sm:$0xff]
    %v111 = vld [vmem:[%s3 + $0x30] sm:$0xff]
    %v112 = vld [vmem:[%s3 + $0x38] sm:$0xff]
    %v113 = vld [vmem:[#allocation6] sm:$0x1]
    %v115 = vperm.slane %v113, 0
    %vm117 = vcmask 523264
    %v119 = vsel %vm117, %v104, 0
    %121 = vmatpush.msra.mxu0 0.0
    %122 = vmatpush.msra.mxu0 0.0
    %123 = vmatpush.msra.mxu0 0.0
    %124 = vmatpush.msra.mxu0 0.0
    %125 = vmatpush.msra.mxu0 0.0
    %126 = vmatpush.msra.mxu0 0.0
    %127 = vmatpush.msra.mxu0 0.0
    %128 = vmatpush.msra.mxu0 0.0
    %129 = vmatpush.msra.mxu0 %v112
    %130 = vmatpush.msra.mxu0 %v111
    %131 = vmatpush.msra.mxu0 %v110
    %132 = vmatpush.msra.mxu0 %v109
    %133 = vmatpush.msra.mxu0 %v108
    %134 = vmatpush.msra.mxu0 %v107
    %135 = vmatpush.msra.mxu0 %v106
    %136 = vmatpush.msra.mxu0 %v105
    %137 = vmatmul.f32.gmra.mxu0 %v119
    %v138 = vpop.f32.mrf.mxu0
    %v139 = vadd.f32 %v115, %v138
    %140 = vdwg.mxu0
    %v141 = vmax.f32 %v139, 0.0
    %v142 = vld [vmem:[%s5] sm:$0xff]
    %v143 = vld [vmem:[%s5 + $0x8] sm:$0xff]
    %v144 = vld [vmem:[%s5 + $0x10] sm:$0xff]
    %v145 = vld [vmem:[%s5 + $0x18] sm:$0xff]
    %v146 = vld [vmem:[%s5 + $0x20] sm:$0xff]
    %v147 = vld [vmem:[%s5 + $0x28] sm:$0xff]
    %v148 = vld [vmem:[%s5 + $0x30] sm:$0xff]
    %v149 = vld [vmem:[%s5 + $0x38] sm:$0xff]
    %v150 = vld [vmem:[%s6] sm:$0x1]
    %v152 = vperm.slane %v150, 0
    %v155 = vsel %vm117, %v141, 0
    %157 = vmatpush.msra.mxu0 0.0
    %158 = vmatpush.msra.mxu0 0.0
    %159 = vmatpush.msra.mxu0 0.0
    %160 = vmatpush.msra.mxu0 0.0
    %161 = vmatpush.msra.mxu0 0.0
    %162 = vmatpush.msra.mxu0 0.0
    %163 = vmatpush.msra.mxu0 0.0
    %164 = vmatpush.msra.mxu0 0.0
    %165 = vmatpush.msra.mxu0 %v149
    %166 = vmatpush.msra.mxu0 %v148
    %167 = vmatpush.msra.mxu0 %v147
    %168 = vmatpush.msra.mxu0 %v146
    %169 = vmatpush.msra.mxu0 %v145
    %170 = vmatpush.msra.mxu0 %v144
    %171 = vmatpush.msra.mxu0 %v143
    %172 = vmatpush.msra.mxu0 %v142
    %173 = vmatmul.f32.gmra.mxu0 %v155
    %v174 = vpop.f32.mrf.mxu0
    %v175 = vadd.f32 %v152, %v174
    %176 = vdwg.mxu0
    %s177 = scalar_lea.vmem [#allocation4], 32
    %v178 = vld [vmem:[%s177] sm:$0xff]
    %v179 = vld [vmem:[%s177 + $0x8] sm:$0xff]
    %v180 = vld [vmem:[%s177 + $0x10] sm:$0xff]
    %v181 = vld [vmem:[%s177 + $0x18] sm:$0xff]
    %s182 = scalar_lea.vmem %s2, 1
    %v183 = vld [vmem:[%s182] sm:$0x1]
    %v185 = vperm.slane %v183, 0
    %187 = vmatpush.msra.mxu0 0.0
    %188 = vmatpush.msra.mxu0 0.0
    %189 = vmatpush.msra.mxu0 0.0
    %190 = vmatpush.msra.mxu0 0.0
    %191 = vmatpush.msra.mxu0 0.0
    %192 = vmatpush.msra.mxu0 0.0
    %193 = vmatpush.msra.mxu0 0.0
    %194 = vmatpush.msra.mxu0 0.0
    %195 = vmatpush.msra.mxu0 0.0
    %196 = vmatpush.msra.mxu0 0.0
    %197 = vmatpush.msra.mxu0 0.0
    %198 = vmatpush.msra.mxu0 0.0
    %199 = vmatpush.msra.mxu0 %v181
    %200 = vmatpush.msra.mxu0 %v180
    %201 = vmatpush.msra.mxu0 %v179
    %202 = vmatpush.msra.mxu0 %v178
    %203 = vmatmul.f32.gmra.mxu0 %v82
    %v204 = vpop.f32.mrf.mxu0
    %v205 = vadd.f32 %v185, %v204
    %206 = vdwg.mxu0
    %v207 = vmax.f32 %v205, 0.0
    %s208 = scalar_lea.vmem %s3, 64
    %v209 = vld [vmem:[%s208] sm:$0xff]
    %v210 = vld [vmem:[%s208 + $0x8] sm:$0xff]
    %v211 = vld [vmem:[%s208 + $0x10] sm:$0xff]
    %v212 = vld [vmem:[%s208 + $0x18] sm:$0xff]
    %v213 = vld [vmem:[%s208 + $0x20] sm:$0xff]
    %v214 = vld [vmem:[%s208 + $0x28] sm:$0xff]
    %v215 = vld [vmem:[%s208 + $0x30] sm:$0xff]
    %v216 = vld [vmem:[%s208 + $0x38] sm:$0xff]
    %s217 = scalar_lea.vmem [#allocation6], 1
    %v218 = vld [vmem:[%s217] sm:$0x1]
    %v220 = vperm.slane %v218, 0
    %v223 = vsel %vm117, %v207, 0
    %225 = vmatpush.msra.mxu0 0.0
    %226 = vmatpush.msra.mxu0 0.0
    %227 = vmatpush.msra.mxu0 0.0
    %228 = vmatpush.msra.mxu0 0.0
    %229 = vmatpush.msra.mxu0 0.0
    %230 = vmatpush.msra.mxu0 0.0
    %231 = vmatpush.msra.mxu0 0.0
    %232 = vmatpush.msra.mxu0 0.0
    %233 = vmatpush.msra.mxu0 %v216
    %234 = vmatpush.msra.mxu0 %v215
    %235 = vmatpush.msra.mxu0 %v214
    %236 = vmatpush.msra.mxu0 %v213
    %237 = vmatpush.msra.mxu0 %v212
    %238 = vmatpush.msra.mxu0 %v211
    %239 = vmatpush.msra.mxu0 %v210
    %240 = vmatpush.msra.mxu0 %v209
    %241 = vmatmul.f32.gmra.mxu0 %v223
    %v242 = vpop.f32.mrf.mxu0
    %v243 = vadd.f32 %v220, %v242
    %244 = vdwg.mxu0
    %v245 = vmax.f32 %v243, 0.0
    %s246 = scalar_lea.vmem %s5, 64
    %v247 = vld [vmem:[%s246] sm:$0xff]
    %v248 = vld [vmem:[%s246 + $0x8] sm:$0xff]
    %v249 = vld [vmem:[%s246 + $0x10] sm:$0xff]
    %v250 = vld [vmem:[%s246 + $0x18] sm:$0xff]
    %v251 = vld [vmem:[%s246 + $0x20] sm:$0xff]
    %v252 = vld [vmem:[%s246 + $0x28] sm:$0xff]
    %v253 = vld [vmem:[%s246 + $0x30] sm:$0xff]
    %v254 = vld [vmem:[%s246 + $0x38] sm:$0xff]
    %s255 = scalar_lea.vmem %s6, 1
    %v256 = vld [vmem:[%s255] sm:$0x1]
    %v258 = vperm.slane %v256, 0
    %v261 = vsel %vm117, %v245, 0
    %263 = vmatpush.msra.mxu0 0.0
    %264 = vmatpush.msra.mxu0 0.0
    %265 = vmatpush.msra.mxu0 0.0
    %266 = vmatpush.msra.mxu0 0.0
    %267 = vmatpush.msra.mxu0 0.0
    %268 = vmatpush.msra.mxu0 0.0
    %269 = vmatpush.msra.mxu0 0.0
    %270 = vmatpush.msra.mxu0 0.0
    %271 = vmatpush.msra.mxu0 %v254
    %272 = vmatpush.msra.mxu0 %v253
    %273 = vmatpush.msra.mxu0 %v252
    %274 = vmatpush.msra.mxu0 %v251
    %275 = vmatpush.msra.mxu0 %v250
    %276 = vmatpush.msra.mxu0 %v249
    %277 = vmatpush.msra.mxu0 %v248
    %278 = vmatpush.msra.mxu0 %v247
    %279 = vmatmul.f32.gmra.mxu0 %v261
    %v280 = vpop.f32.mrf.mxu0
    %v281 = vadd.f32 %v258, %v280
    %282 = vdwg.mxu0
    %s283 = scalar_lea.vmem [#allocation4], 64
    %v284 = vld [vmem:[%s283] sm:$0xff]
    %v285 = vld [vmem:[%s283 + $0x8] sm:$0xff]
    %v286 = vld [vmem:[%s283 + $0x10] sm:$0xff]
    %v287 = vld [vmem:[%s283 + $0x18] sm:$0xff]
    %s288 = scalar_lea.vmem %s2, 2
    %v289 = vld [vmem:[%s288] sm:$0x1]
    %v291 = vperm.slane %v289, 0
    %293 = vmatpush.msra.mxu0 0.0
    %294 = vmatpush.msra.mxu0 0.0
    %295 = vmatpush.msra.mxu0 0.0
    %296 = vmatpush.msra.mxu0 0.0
    %297 = vmatpush.msra.mxu0 0.0
    %298 = vmatpush.msra.mxu0 0.0
    %299 = vmatpush.msra.mxu0 0.0
    %300 = vmatpush.msra.mxu0 0.0
    %301 = vmatpush.msra.mxu0 0.0
    %302 = vmatpush.msra.mxu0 0.0
    %303 = vmatpush.msra.mxu0 0.0
    %304 = vmatpush.msra.mxu0 0.0
    %305 = vmatpush.msra.mxu0 %v287
    %306 = vmatpush.msra.mxu0 %v286
    %307 = vmatpush.msra.mxu0 %v285
    %308 = vmatpush.msra.mxu0 %v284
    %309 = vmatmul.f32.gmra.mxu0 %v82
    %v310 = vpop.f32.mrf.mxu0
    %v311 = vadd.f32 %v291, %v310
    %312 = vdwg.mxu0
    %v313 = vmax.f32 %v311, 0.0
    %s314 = scalar_lea.vmem %s3, 128
    %v315 = vld [vmem:[%s314] sm:$0xff]
    %v316 = vld [vmem:[%s314 + $0x8] sm:$0xff]
    %v317 = vld [vmem:[%s314 + $0x10] sm:$0xff]
    %v318 = vld [vmem:[%s314 + $0x18] sm:$0xff]
    %v319 = vld [vmem:[%s314 + $0x20] sm:$0xff]
    %v320 = vld [vmem:[%s314 + $0x28] sm:$0xff]
    %v321 = vld [vmem:[%s314 + $0x30] sm:$0xff]
    %v322 = vld [vmem:[%s314 + $0x38] sm:$0xff]
    %s323 = scalar_lea.vmem [#allocation6], 2
    %v324 = vld [vmem:[%s323] sm:$0x1]
    %v326 = vperm.slane %v324, 0
    %v329 = vsel %vm117, %v313, 0
    %331 = vmatpush.msra.mxu0 0.0
    %332 = vmatpush.msra.mxu0 0.0
    %333 = vmatpush.msra.mxu0 0.0
    %334 = vmatpush.msra.mxu0 0.0
    %335 = vmatpush.msra.mxu0 0.0
    %336 = vmatpush.msra.mxu0 0.0
    %337 = vmatpush.msra.mxu0 0.0
    %338 = vmatpush.msra.mxu0 0.0
    %339 = vmatpush.msra.mxu0 %v322
    %340 = vmatpush.msra.mxu0 %v321
    %341 = vmatpush.msra.mxu0 %v320
    %342 = vmatpush.msra.mxu0 %v319
    %343 = vmatpush.msra.mxu0 %v318
    %344 = vmatpush.msra.mxu0 %v317
    %345 = vmatpush.msra.mxu0 %v316
    %346 = vmatpush.msra.mxu0 %v315
    %347 = vmatmul.f32.gmra.mxu0 %v329
    %v348 = vpop.f32.mrf.mxu0
    %v349 = vadd.f32 %v326, %v348
    %350 = vdwg.mxu0
    %v351 = vmax.f32 %v349, 0.0
    %s352 = scalar_lea.vmem %s5, 128
    %v353 = vld [vmem:[%s352] sm:$0xff]
    %v354 = vld [vmem:[%s352 + $0x8] sm:$0xff]
    %v355 = vld [vmem:[%s352 + $0x10] sm:$0xff]
    %v356 = vld [vmem:[%s352 + $0x18] sm:$0xff]
    %v357 = vld [vmem:[%s352 + $0x20] sm:$0xff]
    %v358 = vld [vmem:[%s352 + $0x28] sm:$0xff]
    %v359 = vld [vmem:[%s352 + $0x30] sm:$0xff]
    %v360 = vld [vmem:[%s352 + $0x38] sm:$0xff]
    %s361 = scalar_lea.vmem %s6, 2
    %v362 = vld [vmem:[%s361] sm:$0x1]
    %v364 = vperm.slane %v362, 0
    %v367 = vsel %vm117, %v351, 0
    %369 = vmatpush.msra.mxu0 0.0
    %370 = vmatpush.msra.mxu0 0.0
    %371 = vmatpush.msra.mxu0 0.0
    %372 = vmatpush.msra.mxu0 0.0
    %373 = vmatpush.msra.mxu0 0.0
    %374 = vmatpush.msra.mxu0 0.0
    %375 = vmatpush.msra.mxu0 0.0
    %376 = vmatpush.msra.mxu0 0.0
    %377 = vmatpush.msra.mxu0 %v360
    %378 = vmatpush.msra.mxu0 %v359
    %379 = vmatpush.msra.mxu0 %v358
    %380 = vmatpush.msra.mxu0 %v357
    %381 = vmatpush.msra.mxu0 %v356
    %382 = vmatpush.msra.mxu0 %v355
    %383 = vmatpush.msra.mxu0 %v354
    %384 = vmatpush.msra.mxu0 %v353
    %385 = vmatmul.f32.gmra.mxu0 %v367
    %v386 = vpop.f32.mrf.mxu0
    %v387 = vadd.f32 %v364, %v386
    %388 = vdwg.mxu0
    %390 = vrot.lane.b32.xlu0 %v281, 1
    %v391 = vpop.permute.xlu0 %390
    %394 = vrot.lane.b32.xlu0 %v387, 2
    %v395 = vpop.permute.xlu0 %394
    %vm397 = vcmask 7168
    %v398 = vsel %vm397, %v175, %v391
    %vm399 = vcmask 15360
    %v400 = vsel %vm399, %v398, %v395
    %vm401 = vcmask 23552
    %402 = vst.msk [vmem:[%s7] sm:$0xff] %vm401, %v400
    // Predicated region
    $region42: #{tpu_custom_call.1} parent=1 // pred_check
      _
    $region43: #{tpu_custom_call.1} parent=1 // pred_check_branch
      %404 = sbr.rel (0) target = $region45
    $region44: #{tpu_custom_call.1} parent=1 // pred_region
      _
    $region45: #{tpu_custom_call.1} parent=1 // pred_fallthru
      _
    // Predicated region
    $region46: #{tpu_custom_call.1} parent=1 // pred_check
      _
    $region47: #{tpu_custom_call.1} parent=1 // pred_check_branch
      %406 = sbr.rel (0) target = $region49
    $region48: #{tpu_custom_call.1} parent=1 // pred_region
      _
    $region49: #{tpu_custom_call.1} parent=1 // pred_fallthru
      _
    %407 = vsyncpa [#allocation3], 1
    %408 = vsyncpa [#allocation5], 1

</llo_original>
